<compile_context>
chip_gen: v5e
topology: v5e:2x2
jax: 0.10.0
libtpu: 0.0.40
codegen_flags: <defaults>
</compile_context>

<pallas_src>
import math
import jax
import jax.numpy as jnp
from jax import lax
from jax.experimental import pallas as pl
from jax.experimental.pallas import tpu as pltpu


def _gelu_exact(x):
    # PyTorch nn.GELU() default: exact erf-based GELU (computed in f32).
    return 0.5 * x * (1.0 + lax.erf(x * (1.0 / math.sqrt(2.0))))


def _gelu_tanh(x):
    # Optional tanh approximation (transcendental goes to the EUP slot).
    c = math.sqrt(2.0 / math.pi)
    return 0.5 * x * (1.0 + jnp.tanh(c * (x + 0.044715 * x * x * x)))


def _make_kernel(approx_gelu=False):
    gelu = _gelu_tanh if approx_gelu else _gelu_exact

    def dino_head_kernel(x_ref, w1_ref, b1_ref, w2_ref, b2_ref, w3_ref, b3_ref,
                         wl_ref, o_ref, z_ref):
        """Grid = (batch_tile i, out_tile j); j is the fast (inner) axis."""
        j = pl.program_id(1)

        # --- MLP + L2-normalize: only once per batch tile (j == 0). ---------
        @pl.when(j == 0)
        def _compute_bottleneck():
            w_dtype = w1_ref.dtype  # MXU operand dtype (bf16 or f32)
            x = x_ref[...].astype(w_dtype)

            h = jnp.dot(x, w1_ref[...], preferred_element_type=jnp.float32)
            h = gelu(h + b1_ref[...].astype(jnp.float32))

            h = jnp.dot(h.astype(w_dtype), w2_ref[...],
                        preferred_element_type=jnp.float32)
            h = gelu(h + b2_ref[...].astype(jnp.float32))

            z = jnp.dot(h.astype(w_dtype), w3_ref[...],
                        preferred_element_type=jnp.float32)
            z = z + b3_ref[...].astype(jnp.float32)

            # F.normalize(z, dim=-1, p=2, eps=1e-12)
            #   == z * rsqrt(max(sum(z*z), 1e-24))    (rsqrt -> EUP slot)
            sumsq = jnp.sum(z * z, axis=-1, keepdims=True)
            z = z * lax.rsqrt(jnp.maximum(sumsq, 1e-24))

            # Keep the normalized activations in f32 scratch; cast to the
            # (possibly bf16) weight dtype only at each final dot.
            z_ref[...] = z

        # --- Streamed weight-normed last layer: one lane-dense out tile. ----
        out = jnp.dot(z_ref[...].astype(wl_ref.dtype), wl_ref[...],
                      preferred_element_type=jnp.float32)
        o_ref[...] = out.astype(o_ref.dtype)

    return dino_head_kernel


def _block_spec(shape, index_map, buffers=None):
    """BlockSpec with an explicit buffer count (graceful fallback on old jax)."""
    if buffers is None or not hasattr(pl, "Buffered"):
        return pl.BlockSpec(shape, index_map)
    try:
        return pl.BlockSpec(shape, index_map, pipeline_mode=pl.Buffered(buffers))
    except TypeError:  # jax without pipeline_mode kwarg
        return pl.BlockSpec(shape, index_map)


def _pick_tile_b(N, requested):
    if requested is not None:
        return min(requested, N)
    # Prefer large batch tiles (amortizes the wl re-stream) but guarantee >=2
    # batch tiles when N allows, so both v7x TensorCores get 'parallel' work.
    cap = 256
    if N >= 16:
        cap = min(cap, max(8, N // 2))
    cap = min(cap, N)
    best = None
    for t in range(8, cap + 1, 8):
        if N % t == 0:
            best = t
    return best if best is not None else N


def _pick_tile_out(out_dim, requested):
    if requested is not None:
        return min(requested, out_dim)
    cap = min(2048, out_dim)
    best = None
    for t in range(128, cap + 1, 128):
        if out_dim % t == 0:
            best = t
    return best if best is not None else out_dim


def _padded_bytes(shape, dtype):
    """Bytes of one VMEM buffer with (8,128) tile padding (conservative)."""
    itemsize = jnp.dtype(dtype).itemsize
    if len(shape) == 1:
        lead, r, c = 1, 1, shape[0]
    else:
        lead = 1
        for d in shape[:-2]:
            lead *= d
        r, c = shape[-2], shape[-1]
    r_pad = ((r + 7) // 8) * 8
    c_pad = ((c + 127) // 128) * 128
    return lead * r_pad * c_pad * itemsize


def dino_head_forward(x, params, *, tile_b=None, tile_out=None,
                      weights_dtype=jnp.bfloat16, out_dtype=None,
                      wl_buffers=3, approx_gelu=False, vmem_limit_bytes=None):
    """x: (N, in_dim). params: dict of pre-transposed weights/biases
    (`wl` already weight-normed with g=1).  Weights are cast to
    `weights_dtype` (default bf16, f32 accumulation); pass None to keep the
    caller's dtype."""
    N, in_dim = x.shape
    w1, b1, w2, b2, w3, b3, wl = (params["w1"], params["b1"], params["w2"],
                                  params["b2"], params["w3"], params["b3"],
                                  params["wl"])
    if weights_dtype is not None:
        w1, w2, w3, wl = (a.astype(weights_dtype) for a in (w1, w2, w3, wl))
        # biases stay in their original (f32) dtype: tiny & added in f32 anyway.

    hidden = w1.shape[1]
    bottleneck = w3.shape[1]
    out_dim = wl.shape[1]
    out_dtype = x.dtype if out_dtype is None else out_dtype

    tile_b = _pick_tile_b(N, tile_b)
    tile_out = _pick_tile_out(out_dim, tile_out)
    assert N % tile_b == 0, (N, tile_b)
    assert out_dim % tile_out == 0, (out_dim, tile_out)
    assert tile_b % 8 == 0 or tile_b == N
    assert tile_out % 128 == 0 or tile_out == out_dim

    n_b_tiles = N // tile_b
    n_out_tiles = out_dim // tile_out
    grid = (n_b_tiles, n_out_tiles)

    # wl buffering: deeper pipeline to hide the j==0 MLP bubble, but never more
    # buffers than distinct out tiles (if there is only one tile it is resident).
    wl_buf = 1 if n_out_tiles == 1 else max(2, min(wl_buffers, n_out_tiles))

    # Explicit scoped-VMEM budget (default limits are 16/32 MiB and too small
    # at real DINO shapes): residents x1 + x x2 + wl x buf + out x2 + scratch
    # + GELU temporaries, with headroom.
    if vmem_limit_bytes is None:
        est = 0
        for a in (w1, b1, w2, b2, w3, b3):          # single-buffered residents
            est += _padded_bytes(a.shape, a.dtype)
        est += 2 * _padded_bytes((tile_b, in_dim), x.dtype)
        est += wl_buf * _padded_bytes((bottleneck, tile_out), wl.dtype)
        est += 2 * _padded_bytes((tile_b, tile_out), out_dtype)
        est += _padded_bytes((tile_b, bottleneck), jnp.float32)       # z scratch
        est += 4 * _padded_bytes((tile_b, max(hidden, in_dim, bottleneck)),
                                 jnp.float32)                         # temporaries
        vmem_limit_bytes = int(est * 1.5) + (4 << 20)

    # Constant-index (resident) MLP weights: single-buffered (no pipelining
    # benefit for blocks whose index never changes; saves VMEM, key on v7x).
    resident = lambda shape: _block_spec(shape, lambda i, j: (0, 0), buffers=1)

    kernel = _make_kernel(approx_gelu=approx_gelu)

    return pl.pallas_call(
        kernel,
        out_shape=jax.ShapeDtypeStruct((N, out_dim), out_dtype),
        grid_spec=pltpu.PrefetchScalarGridSpec(
            num_scalar_prefetch=0,
            grid=grid,
            in_specs=[
                pl.BlockSpec((tile_b, in_dim), lambda i, j: (i, 0)),   # x tile
                resident((in_dim, hidden)),                            # w1
                resident((1, hidden)),                                 # b1
                resident((hidden, hidden)),                            # w2
                resident((1, hidden)),                                 # b2
                resident((hidden, bottleneck)),                        # w3
                resident((1, bottleneck)),                             # b3
                _block_spec((bottleneck, tile_out), lambda i, j: (0, j),
                            buffers=wl_buf),                           # wl tile (streamed)
            ],
            out_specs=pl.BlockSpec((tile_b, tile_out), lambda i, j: (i, j)),
            scratch_shapes=[
                # Normalized bottleneck activations (f32), reused across out tiles.
                pltpu.VMEM((tile_b, bottleneck), jnp.float32),
            ],
        ),
        compiler_params=pltpu.CompilerParams(
            dimension_semantics=("parallel", "arbitrary"),
            vmem_limit_bytes=vmem_limit_bytes,
        ),
    )(x, w1, b1, w2, b2, w3, b3, wl)


def init_params(key, in_dim, out_dim, hidden_dim, bottleneck_dim, std=0.02):
    """Deterministic synthetic init mirroring DINOHead.__init__ (nlayers=3,
    use_bn=False): trunc_normal(std=0.02) weights, zero biases, weight_norm
    on the last layer with g = 1 (folded here)."""
    ks = jax.random.split(key, 4)

    def tn(k, shape):
        return jax.random.truncated_normal(k, -2.0, 2.0, shape, jnp.float32) * std

    # PyTorch Linear stores (out, in); we store transposed (in, out) for x @ W.
    w1 = tn(ks[0], (in_dim, hidden_dim))
    w2 = tn(ks[1], (hidden_dim, hidden_dim))
    w3 = tn(ks[2], (hidden_dim, bottleneck_dim))
    b1 = jnp.zeros((1, hidden_dim), jnp.float32)
    b2 = jnp.zeros((1, hidden_dim), jnp.float32)
    b3 = jnp.zeros((1, bottleneck_dim), jnp.float32)

    # last_layer: weight_norm(Linear(bottleneck, out, bias=False)), weight_g = 1.
    # v: (out, bottleneck); effective W = v / ||v||_row; pass transposed.
    v = tn(ks[3], (out_dim, bottleneck_dim))
    v_norm = jnp.sqrt(jnp.sum(v * v, axis=1, keepdims=True))
    wl = (v / jnp.maximum(v_norm, 1e-12)).T  # (bottleneck, out)

    return dict(w1=w1, b1=b1, w2=w2, b2=b2, w3=w3, b3=b3, wl=wl)


def _reference(x, p):
    h = _gelu_exact(x @ p["w1"].astype(jnp.float32) + p["b1"].astype(jnp.float32))
    h = _gelu_exact(h @ p["w2"].astype(jnp.float32) + p["b2"].astype(jnp.float32))
    z = h @ p["w3"].astype(jnp.float32) + p["b3"].astype(jnp.float32)
    z = z / jnp.maximum(jnp.sqrt(jnp.sum(z * z, -1, keepdims=True)), 1e-12)
    return z @ p["wl"].astype(jnp.float32)


if __name__ == "__main__":
    # Small shapes consistent with the module (real DINOHead: in_dim=768,
    # hidden=2048, bottleneck=256, out_dim=65536 -- same kernel, bigger tiles).
    N, in_dim, hidden_dim, bottleneck_dim, out_dim = 32, 64, 128, 64, 512

    key = jax.random.PRNGKey(0)
    kx, kp = jax.random.split(key)
    x = jax.random.normal(kx, (N, in_dim), jnp.float32)
    params = init_params(kp, in_dim, out_dim, hidden_dim, bottleneck_dim)
    ref = _reference(x, params)

    # f32-weight path, explicit 2x2 grid (batch tiles x lane-dense out tiles):
    # exercises single-buffered residents + Buffered wl streaming.
    out_f32 = dino_head_forward(x, params, tile_b=16, tile_out=256,
                                weights_dtype=jnp.float32)
    out_f32 = jax.block_until_ready(out_f32)
    assert out_f32.shape == (N, out_dim)
    assert jnp.allclose(out_f32, ref, atol=1e-5, rtol=1e-5)

    # Default path: bf16 weights (f32 accumulation), auto tile selection
    # (>=2 batch tiles for megacore), loosened tolerance for bf16 operands.
    out_bf16 = dino_head_forward(x, params)
    out_bf16 = jax.block_until_ready(out_bf16)
    assert out_bf16.shape == (N, out_dim)
    assert jnp.allclose(out_bf16.astype(jnp.float32), ref, atol=5e-2, rtol=5e-2)

    print("KERNEL_OK")
</pallas_src>

<mosaic_0001>
module attributes {stable_mosaic.version = 11 : i64} {
  func.func @dino_head_kernel(%arg0: i32, %arg1: i32, %arg2: memref<16x64xf32, #tpu.memory_space<vmem>>, %arg3: memref<64x128xf32, #tpu.memory_space<vmem>>, %arg4: memref<1x128xf32, #tpu.memory_space<vmem>>, %arg5: memref<128x128xf32, #tpu.memory_space<vmem>>, %arg6: memref<1x128xf32, #tpu.memory_space<vmem>>, %arg7: memref<128x64xf32, #tpu.memory_space<vmem>>, %arg8: memref<1x64xf32, #tpu.memory_space<vmem>>, %arg9: memref<64x256xf32, #tpu.memory_space<vmem>>, %arg10: memref<16x256xf32, #tpu.memory_space<vmem>>, %arg11: memref<16x64xf32, #tpu.memory_space<vmem>>) attributes {dimension_semantics = [#tpu.dimension_semantics<parallel>, #tpu.dimension_semantics<arbitrary>], iteration_bounds = array<i64: 2, 2>, scalar_prefetch = 0 : i64, scratch_operands = 1 : i64, tpu.core_type = #tpu.core_type<tc>, window_params = [{transform_indices = @transform_0, window_bounds = array<i64: 16, 64>}, {pipeline_mode = #tpu.pipeline_mode<synchronous>, transform_indices = @transform_1, window_bounds = array<i64: 64, 128>}, {pipeline_mode = #tpu.pipeline_mode<synchronous>, transform_indices = @transform_2, window_bounds = array<i64: 1, 128>}, {pipeline_mode = #tpu.pipeline_mode<synchronous>, transform_indices = @transform_3, window_bounds = array<i64: 128, 128>}, {pipeline_mode = #tpu.pipeline_mode<synchronous>, transform_indices = @transform_4, window_bounds = array<i64: 1, 128>}, {pipeline_mode = #tpu.pipeline_mode<synchronous>, transform_indices = @transform_5, window_bounds = array<i64: 128, 64>}, {pipeline_mode = #tpu.pipeline_mode<synchronous>, transform_indices = @transform_6, window_bounds = array<i64: 1, 64>}, {pipeline_mode = #tpu.pipeline_mode<double_buffered>, transform_indices = @transform_7, window_bounds = array<i64: 64, 256>}, {transform_indices = @transform_8, window_bounds = array<i64: 16, 256>}]} {
    %c0_i32 = arith.constant 0 : i32
    %0 = arith.cmpi eq, %arg1, %c0_i32 : i32
    %1 = arith.extui %0 : i1 to i32
    %c0_i32_0 = arith.constant 0 : i32
    %2 = arith.cmpi ne, %1, %c0_i32_0 : i32
    scf.if %2 {
      %c0_6 = arith.constant 0 : index
      %c0_7 = arith.constant 0 : index
      %7 = vector.load %arg2[%c0_6, %c0_7] : memref<16x64xf32, #tpu.memory_space<vmem>>, vector<16x64xf32>
      %c0_8 = arith.constant 0 : index
      %c0_9 = arith.constant 0 : index
      %8 = vector.load %arg3[%c0_8, %c0_9] : memref<64x128xf32, #tpu.memory_space<vmem>>, vector<64x128xf32>
      %cst_10 = arith.constant dense<0.000000e+00> : vector<16x128xf32>
      %9 = tpu.matmul %7, %8, %cst_10 {dimension_numbers = #tpu.dot_dimension_numbers<[1], [0], [0], [1], [0, 0, 1, 1], [], []>} : vector<16x64xf32>, vector<64x128xf32>, vector<16x128xf32> -> vector<16x128xf32>
      %c0_11 = arith.constant 0 : index
      %c0_12 = arith.constant 0 : index
      %10 = vector.load %arg4[%c0_11, %c0_12] : memref<1x128xf32, #tpu.memory_space<vmem>>, vector<1x128xf32>
      %11 = vector.broadcast %10 : vector<1x128xf32> to vector<16x128xf32>
      %12 = arith.addf %9, %11 : vector<16x128xf32>
      %cst_13 = arith.constant 5.000000e-01 : f32
      %13 = vector.broadcast %cst_13 : f32 to vector<16x128xf32>
      %14 = arith.mulf %13, %12 : vector<16x128xf32>
      %cst_14 = arith.constant 0.707106769 : f32
      %15 = vector.broadcast %cst_14 : f32 to vector<16x128xf32>
      %16 = arith.mulf %12, %15 : vector<16x128xf32>
      %17 = math.erf %16 : vector<16x128xf32>
      %cst_15 = arith.constant 1.000000e+00 : f32
      %18 = vector.broadcast %cst_15 : f32 to vector<16x128xf32>
      %19 = arith.addf %18, %17 : vector<16x128xf32>
      %20 = arith.mulf %14, %19 : vector<16x128xf32>
      %c0_16 = arith.constant 0 : index
      %c0_17 = arith.constant 0 : index
      %21 = vector.load %arg5[%c0_16, %c0_17] : memref<128x128xf32, #tpu.memory_space<vmem>>, vector<128x128xf32>
      %cst_18 = arith.constant dense<0.000000e+00> : vector<16x128xf32>
      %22 = tpu.matmul %20, %21, %cst_18 {dimension_numbers = #tpu.dot_dimension_numbers<[1], [0], [0], [1], [0, 0, 1, 1], [], []>} : vector<16x128xf32>, vector<128x128xf32>, vector<16x128xf32> -> vector<16x128xf32>
      %c0_19 = arith.constant 0 : index
      %c0_20 = arith.constant 0 : index
      %23 = vector.load %arg6[%c0_19, %c0_20] : memref<1x128xf32, #tpu.memory_space<vmem>>, vector<1x128xf32>
      %24 = vector.broadcast %23 : vector<1x128xf32> to vector<16x128xf32>
      %25 = arith.addf %22, %24 : vector<16x128xf32>
      %cst_21 = arith.constant 5.000000e-01 : f32
      %26 = vector.broadcast %cst_21 : f32 to vector<16x128xf32>
      %27 = arith.mulf %26, %25 : vector<16x128xf32>
      %cst_22 = arith.constant 0.707106769 : f32
      %28 = vector.broadcast %cst_22 : f32 to vector<16x128xf32>
      %29 = arith.mulf %25, %28 : vector<16x128xf32>
      %30 = math.erf %29 : vector<16x128xf32>
      %cst_23 = arith.constant 1.000000e+00 : f32
      %31 = vector.broadcast %cst_23 : f32 to vector<16x128xf32>
      %32 = arith.addf %31, %30 : vector<16x128xf32>
      %33 = arith.mulf %27, %32 : vector<16x128xf32>
      %c0_24 = arith.constant 0 : index
      %c0_25 = arith.constant 0 : index
      %34 = vector.load %arg7[%c0_24, %c0_25] : memref<128x64xf32, #tpu.memory_space<vmem>>, vector<128x64xf32>
      %cst_26 = arith.constant dense<0.000000e+00> : vector<16x64xf32>
      %35 = tpu.matmul %33, %34, %cst_26 {dimension_numbers = #tpu.dot_dimension_numbers<[1], [0], [0], [1], [0, 0, 1, 1], [], []>} : vector<16x128xf32>, vector<128x64xf32>, vector<16x64xf32> -> vector<16x64xf32>
      %c0_27 = arith.constant 0 : index
      %c0_28 = arith.constant 0 : index
      %36 = vector.load %arg8[%c0_27, %c0_28] : memref<1x64xf32, #tpu.memory_space<vmem>>, vector<1x64xf32>
      %37 = vector.broadcast %36 : vector<1x64xf32> to vector<16x64xf32>
      %38 = arith.addf %35, %37 : vector<16x64xf32>
      %39 = arith.mulf %38, %38 : vector<16x64xf32>
      %cst_29 = arith.constant dense<0.000000e+00> : vector<16xf32>
      %40 = vector.multi_reduction <add>, %39, %cst_29 [1] : vector<16x64xf32> to vector<16xf32>
      %41 = vector.shape_cast %40 : vector<16xf32> to vector<16x1xf32>
      %cst_30 = arith.constant 1.000000e-24 : f32
      %42 = vector.broadcast %cst_30 : f32 to vector<16x1xf32>
      %43 = arith.maximumf %41, %42 : vector<16x1xf32>
      %44 = math.rsqrt %43 : vector<16x1xf32>
      %45 = vector.broadcast %44 : vector<16x1xf32> to vector<16x64xf32>
      %46 = arith.mulf %38, %45 : vector<16x64xf32>
      %c0_31 = arith.constant 0 : index
      %c0_32 = arith.constant 0 : index
      %47 = vector.load %arg11[%c0_31, %c0_32] : memref<16x64xf32, #tpu.memory_space<vmem>>, vector<16x64xf32>
      tpu.vector_store %arg11[%c0_31, %c0_32], %46 {strides = array<i32>} : memref<16x64xf32, #tpu.memory_space<vmem>>, vector<16x64xf32>,
    } else {
    }
    %c0 = arith.constant 0 : index
    %c0_1 = arith.constant 0 : index
    %3 = vector.load %arg11[%c0, %c0_1] : memref<16x64xf32, #tpu.memory_space<vmem>>, vector<16x64xf32>
    %c0_2 = arith.constant 0 : index
    %c0_3 = arith.constant 0 : index
    %4 = vector.load %arg9[%c0_2, %c0_3] : memref<64x256xf32, #tpu.memory_space<vmem>>, vector<64x256xf32>
    %cst = arith.constant dense<0.000000e+00> : vector<16x256xf32>
    %5 = tpu.matmul %3, %4, %cst {dimension_numbers = #tpu.dot_dimension_numbers<[1], [0], [0], [1], [0, 0, 1, 1], [], []>} : vector<16x64xf32>, vector<64x256xf32>, vector<16x256xf32> -> vector<16x256xf32>
    %c0_4 = arith.constant 0 : index
    %c0_5 = arith.constant 0 : index
    %6 = vector.load %arg10[%c0_4, %c0_5] : memref<16x256xf32, #tpu.memory_space<vmem>>, vector<16x256xf32>
    tpu.vector_store %arg10[%c0_4, %c0_5], %5 {strides = array<i32>} : memref<16x256xf32, #tpu.memory_space<vmem>>, vector<16x256xf32>,
    return
  }
  func.func @transform_0(%arg0: i32, %arg1: i32) -> (i32, i32) {
    %c0_i32 = arith.constant 0 : i32
    %c0_i32_0 = arith.constant 0 : i32
    return %arg0, %c0_i32 : i32, i32
  }
  func.func @transform_1(%arg0: i32, %arg1: i32) -> (i32, i32) {
    %c0_i32 = arith.constant 0 : i32
    %c0_i32_0 = arith.constant 0 : i32
    %c0_i32_1 = arith.constant 0 : i32
    return %c0_i32, %c0_i32_0 : i32, i32
  }
  func.func @transform_2(%arg0: i32, %arg1: i32) -> (i32, i32) {
    %c0_i32 = arith.constant 0 : i32
    %c0_i32_0 = arith.constant 0 : i32
    %c0_i32_1 = arith.constant 0 : i32
    return %c0_i32, %c0_i32_0 : i32, i32
  }
  func.func @transform_3(%arg0: i32, %arg1: i32) -> (i32, i32) {
    %c0_i32 = arith.constant 0 : i32
    %c0_i32_0 = arith.constant 0 : i32
    %c0_i32_1 = arith.constant 0 : i32
    return %c0_i32, %c0_i32_0 : i32, i32
  }
  func.func @transform_4(%arg0: i32, %arg1: i32) -> (i32, i32) {
    %c0_i32 = arith.constant 0 : i32
    %c0_i32_0 = arith.constant 0 : i32
    %c0_i32_1 = arith.constant 0 : i32
    return %c0_i32, %c0_i32_0 : i32, i32
  }
  func.func @transform_5(%arg0: i32, %arg1: i32) -> (i32, i32) {
    %c0_i32 = arith.constant 0 : i32
    %c0_i32_0 = arith.constant 0 : i32
    %c0_i32_1 = arith.constant 0 : i32
    return %c0_i32, %c0_i32_0 : i32, i32
  }
  func.func @transform_6(%arg0: i32, %arg1: i32) -> (i32, i32) {
    %c0_i32 = arith.constant 0 : i32
    %c0_i32_0 = arith.constant 0 : i32
    %c0_i32_1 = arith.constant 0 : i32
    return %c0_i32, %c0_i32_0 : i32, i32
  }
  func.func @transform_7(%arg0: i32, %arg1: i32) -> (i32, i32) {
    %c0_i32 = arith.constant 0 : i32
    %c0_i32_0 = arith.constant 0 : i32
    return %c0_i32, %arg1 : i32, i32
  }
  func.func @transform_8(%arg0: i32, %arg1: i32) -> (i32, i32) {
    %c0_i32 = arith.constant 0 : i32
    return %arg0, %arg1 : i32, i32
  }
}

</mosaic_0001>

<llo_original>
// kernel: tpu_custom_call.1
$region0: #{tpu_custom_call.1}
  #allocation0 [shape = 'u32[]', space=smem, size = 0x4, offset = 0x4, fixed_abs, tag = 'smem constant byte address 0x4 - core index']
  #allocation1 [shape = 'u32[72,128]{1,0:T(1,128)}', space=vmem, size = 0x9000, scoped, tag = 'internal scratch']
  #allocation2 [shape = 'f32[16,64]{1,0:T(8,128)}', space=vmem, size = 0x2000, scoped, tag = 'scratch operand']
  %s0 = inlined_call_operand.hbm [shape: f32[32,64], index: 0, kind: input, shape index: {}]
  %s1 = inlined_call_operand.vmem [shape: f32[64,128], index: 1, kind: input, shape index: {}]
  %s2 = inlined_call_operand.vmem [shape: f32[1,128], index: 2, kind: input, shape index: {}]
  %s3 = inlined_call_operand.vmem [shape: f32[128,128], index: 3, kind: input, shape index: {}]
  %s4 = inlined_call_operand.vmem [shape: f32[1,128], index: 4, kind: input, shape index: {}]
  %s5 = inlined_call_operand.vmem [shape: f32[128,64], index: 5, kind: input, shape index: {}]
  %s6 = inlined_call_operand.vmem [shape: f32[1,64], index: 6, kind: input, shape index: {}]
  %s7 = inlined_call_operand.hbm [shape: f32[64,512], index: 7, kind: input, shape index: {}]
  %s8 = inlined_call_operand.hbm [shape: f32[32,512], index: 8, kind: output, shape index: {}]
  %s9 = sld [smem:[#allocation0]]
  $region77: #{tpu_custom_call.1} parent=0
    _
  %s11 = ssub.s32 1, %s9
  %s12 = scalar_select 0, %s11, %s9
  $region1: #{tpu_custom_call.1} parent=0
    #allocation3 [shape = 'u8[16384]{0}', space=vmem, size = 0x4000, scoped, tag = 'input window, operand 0']
    #allocation4 [shape = 's32[2]{0}', space=sflag, size = 0x8, scoped, tag = 'scoped memory for tpu_custom_call.1']
    #allocation5 [shape = 's32[2]{0}', space=sflag, size = 0x8, scoped, tag = 'scoped memory for tpu_custom_call.1']
    #allocation6 [shape = 'u8[131072]{0}', space=vmem, size = 0x20000, scoped, tag = 'input window, operand 7']
    #allocation7 [shape = 's32[2]{0}', space=sflag, size = 0x8, scoped, tag = 'scoped memory for tpu_custom_call.1']
    #allocation8 [shape = 'u8[32768]{0}', space=vmem, size = 0x8000, scoped, tag = 'output window, operand 0']
    %13 = vsyncpa [#allocation4], 0
    %s14 = scalar_lea.sflag [#allocation4], 1
    %15 = vsyncpa %s14, 0
    %16 = vsyncpa [#allocation7], 0
    %s17 = scalar_lea.sflag [#allocation7], 1
    %18 = vsyncpa %s17, 0
    %19 = vsyncpa [#allocation5], 0
    %s20 = scalar_lea.sflag [#allocation5], 1
    %21 = vsyncpa %s20, 0
    loop: start=0, step=1, limit=6
    $region2: #{tpu_custom_call.1} parent=1 // loop_pre_header
      _
    $region3: #{tpu_custom_call.1} parent=1 // loop_header
      %s23 = sphi 0, %s27
      %p24 = scmp.ge.s32.totalorder %s23, 6
      %s30 = sphi 0, %s42
      %s31 = sphi 0, %s38
      %s32 = sphi 0, %s30
      %s33 = sphi 0, %s31
      %s34 = sphi 0, %s32
      %s35 = sphi 0, %s33
      %s45 = sphi 0, %s47
      %s48 = sphi 0, %s45
      %s49 = sphi 0, %s48
      %s65 = sphi 0, %s49
      %s69 = sphi 0, %s69
      %s71 = sphi 0, %s69
      %s72 = sphi 0, %s71
      %s86 = sphi 0, %s72
      %s90 = sphi 0, %s90
      %s92 = sphi 0, %s90
      %s93 = sphi 0, %s92
      %s107 = sphi 0, %s93
      %s111 = sphi 0, %s111
      %s113 = sphi 0, %s111
      %s114 = sphi 0, %s113
      %s128 = sphi 0, %s114
      %s132 = sphi 0, %s132
      %s134 = sphi 0, %s132
      %s135 = sphi 0, %s134
      %s149 = sphi 0, %s135
      %s153 = sphi 0, %s153
      %s155 = sphi 0, %s153
      %s156 = sphi 0, %s155
      %s170 = sphi 0, %s156
      %s174 = sphi 0, %s174
      %s176 = sphi 0, %s174
      %s177 = sphi 0, %s176
      %s191 = sphi 0, %s177
      %s197 = sphi 0, %s199
      %s200 = sphi 0, %s197
      %s201 = sphi 0, %s200
      %s217 = sphi 0, %s201
      %s225 = sphi 0, %s227
      %s228 = sphi 0, %s225
      %s229 = sphi 0, %s228
      %s245 = sphi 0, %s229
    $region4: #{tpu_custom_call.1} parent=1 // loop_header_branch
      %26 = sbr.rel (%p24) target = $region8
    $region5: #{tpu_custom_call.1} parent=1 // loop_body
      %s28 = ssub.s32 %s23, 1
      %s29 = ssub.s32 %s23, 2
      %s36 = sadd.s32 1, %s31
      %p37 = scmp.ge.s32.totalorder %s36, 2
      %s38 = scalar_select %p37, 0, %s36
      %s39 = sadd.s32 1, %s30
      %s40 = scalar_select %p37, %s39, %s30
      %p41 = scmp.ge.s32.totalorder %s40, 2
      %s42 = scalar_select %p41, 0, %s40
      %s43 = ssub.s32 %s30, %s42
      %p44 = scmp.eq.s32.totalorder %s43, 0
      %s46 = sadd.s32 %s45, 1
      %s47 = scalar_select %p44, %s45, %s46
      %p50 = pneg %p44
      %p51 = scmp.eq.s32.totalorder %s23, 3
      %p52 = por %p50, %p51
      %p53 = scmp.ne.s32.totalorder %s45, %s48
      %p54 = scmp.eq.s32.totalorder %s23, 0
      %p55 = por %p53, %p54
      %p56 = scmp.ne.s32.totalorder %s45, %s48
      %p57 = scmp.eq.s32.totalorder %s28, 3
      %p58 = por %p56, %p57
      %p59 = scmp.ne.s32.totalorder %s48, %s49
      %p60 = scmp.eq.s32.totalorder %s28, 0
      %p61 = por %p59, %p60
      %p62 = scmp.ne.s32.totalorder %s48, %s49
      %p63 = scmp.eq.s32.totalorder %s29, 3
      %p64 = por %p62, %p63
      %p66 = scmp.ne.s32.totalorder %s49, %s65
      %p67 = scmp.eq.s32.totalorder %s29, 0
      %p68 = por %p66, %p67
      %s70 = sadd.s32 %s69, 1
      %p73 = scmp.eq.s32.totalorder %s23, 3
      %p74 = scmp.ne.s32.totalorder %s69, %s71
      %p75 = scmp.eq.s32.totalorder %s23, 0
      %p76 = por %p74, %p75
      %p77 = scmp.ne.s32.totalorder %s69, %s71
      %p78 = scmp.eq.s32.totalorder %s28, 3
      %p79 = por %p77, %p78
      %p80 = scmp.ne.s32.totalorder %s71, %s72
      %p81 = scmp.eq.s32.totalorder %s28, 0
      %p82 = por %p80, %p81
      %p83 = scmp.ne.s32.totalorder %s71, %s72
      %p84 = scmp.eq.s32.totalorder %s29, 3
      %p85 = por %p83, %p84
      %p87 = scmp.ne.s32.totalorder %s72, %s86
      %p88 = scmp.eq.s32.totalorder %s29, 0
      %p89 = por %p87, %p88
      %s91 = sadd.s32 %s90, 1
      %p94 = scmp.eq.s32.totalorder %s23, 3
      %p95 = scmp.ne.s32.totalorder %s90, %s92
      %p96 = scmp.eq.s32.totalorder %s23, 0
      %p97 = por %p95, %p96
      %p98 = scmp.ne.s32.totalorder %s90, %s92
      %p99 = scmp.eq.s32.totalorder %s28, 3
      %p100 = por %p98, %p99
      %p101 = scmp.ne.s32.totalorder %s92, %s93
      %p102 = scmp.eq.s32.totalorder %s28, 0
      %p103 = por %p101, %p102
      %p104 = scmp.ne.s32.totalorder %s92, %s93
      %p105 = scmp.eq.s32.totalorder %s29, 3
      %p106 = por %p104, %p105
      %p108 = scmp.ne.s32.totalorder %s93, %s107
      %p109 = scmp.eq.s32.totalorder %s29, 0
      %p110 = por %p108, %p109
      %s112 = sadd.s32 %s111, 1
      %p115 = scmp.eq.s32.totalorder %s23, 3
      %p116 = scmp.ne.s32.totalorder %s111, %s113
      %p117 = scmp.eq.s32.totalorder %s23, 0
      %p118 = por %p116, %p117
      %p119 = scmp.ne.s32.totalorder %s111, %s113
      %p120 = scmp.eq.s32.totalorder %s28, 3
      %p121 = por %p119, %p120
      %p122 = scmp.ne.s32.totalorder %s113, %s114
      %p123 = scmp.eq.s32.totalorder %s28, 0
      %p124 = por %p122, %p123
      %p125 = scmp.ne.s32.totalorder %s113, %s114
      %p126 = scmp.eq.s32.totalorder %s29, 3
      %p127 = por %p125, %p126
      %p129 = scmp.ne.s32.totalorder %s114, %s128
      %p130 = scmp.eq.s32.totalorder %s29, 0
      %p131 = por %p129, %p130
      %s133 = sadd.s32 %s132, 1
      %p136 = scmp.eq.s32.totalorder %s23, 3
      %p137 = scmp.ne.s32.totalorder %s132, %s134
      %p138 = scmp.eq.s32.totalorder %s23, 0
      %p139 = por %p137, %p138
      %p140 = scmp.ne.s32.totalorder %s132, %s134
      %p141 = scmp.eq.s32.totalorder %s28, 3
      %p142 = por %p140, %p141
      %p143 = scmp.ne.s32.totalorder %s134, %s135
      %p144 = scmp.eq.s32.totalorder %s28, 0
      %p145 = por %p143, %p144
      %p146 = scmp.ne.s32.totalorder %s134, %s135
      %p147 = scmp.eq.s32.totalorder %s29, 3
      %p148 = por %p146, %p147
      %p150 = scmp.ne.s32.totalorder %s135, %s149
      %p151 = scmp.eq.s32.totalorder %s29, 0
      %p152 = por %p150, %p151
      %s154 = sadd.s32 %s153, 1
      %p157 = scmp.eq.s32.totalorder %s23, 3
      %p158 = scmp.ne.s32.totalorder %s153, %s155
      %p159 = scmp.eq.s32.totalorder %s23, 0
      %p160 = por %p158, %p159
      %p161 = scmp.ne.s32.totalorder %s153, %s155
      %p162 = scmp.eq.s32.totalorder %s28, 3
      %p163 = por %p161, %p162
      %p164 = scmp.ne.s32.totalorder %s155, %s156
      %p165 = scmp.eq.s32.totalorder %s28, 0
      %p166 = por %p164, %p165
      %p167 = scmp.ne.s32.totalorder %s155, %s156
      %p168 = scmp.eq.s32.totalorder %s29, 3
      %p169 = por %p167, %p168
      %p171 = scmp.ne.s32.totalorder %s156, %s170
      %p172 = scmp.eq.s32.totalorder %s29, 0
      %p173 = por %p171, %p172
      %s175 = sadd.s32 %s174, 1
      %p178 = scmp.eq.s32.totalorder %s23, 3
      %p179 = scmp.ne.s32.totalorder %s174, %s176
      %p180 = scmp.eq.s32.totalorder %s23, 0
      %p181 = por %p179, %p180
      %p182 = scmp.ne.s32.totalorder %s174, %s176
      %p183 = scmp.eq.s32.totalorder %s28, 3
      %p184 = por %p182, %p183
      %p185 = scmp.ne.s32.totalorder %s176, %s177
      %p186 = scmp.eq.s32.totalorder %s28, 0
      %p187 = por %p185, %p186
      %p188 = scmp.ne.s32.totalorder %s176, %s177
      %p189 = scmp.eq.s32.totalorder %s29, 3
      %p190 = por %p188, %p189
      %p192 = scmp.ne.s32.totalorder %s177, %s191
      %p193 = scmp.eq.s32.totalorder %s29, 0
      %p194 = por %p192, %p193
      %s195 = ssub.s32 %s31, %s38
      %p196 = scmp.eq.s32.totalorder %s195, 0
      %s198 = sadd.s32 %s197, 1
      %s199 = scalar_select %p196, %s197, %s198
      %p202 = pneg %p196
      %p203 = scmp.eq.s32.totalorder %s23, 3
      %p204 = por %p202, %p203
      %p205 = scmp.ne.s32.totalorder %s197, %s200
      %p206 = scmp.eq.s32.totalorder %s23, 0
      %p207 = por %p205, %p206
      %p208 = scmp.ne.s32.totalorder %s197, %s200
      %p209 = scmp.eq.s32.totalorder %s28, 3
      %p210 = por %p208, %p209
      %p211 = scmp.ne.s32.totalorder %s200, %s201
      %p212 = scmp.eq.s32.totalorder %s28, 0
      %p213 = por %p211, %p212
      %p214 = scmp.ne.s32.totalorder %s200, %s201
      %p215 = scmp.eq.s32.totalorder %s29, 3
      %p216 = por %p214, %p215
      %p218 = scmp.ne.s32.totalorder %s201, %s217
      %p219 = scmp.eq.s32.totalorder %s29, 0
      %p220 = por %p218, %p219
      %s221 = ssub.s32 %s30, %s42
      %s222 = ssub.s32 %s31, %s38
      %s223 = sor.u32 %s221, %s222
      %p224 = scmp.eq.s32.totalorder %s223, 0
      %s226 = sadd.s32 %s225, 1
      %s227 = scalar_select %p224, %s225, %s226
      %p230 = pneg %p224
      %p231 = scmp.eq.s32.totalorder %s23, 3
      %p232 = por %p230, %p231
      %p233 = scmp.ne.s32.totalorder %s225, %s228
      %p234 = scmp.eq.s32.totalorder %s23, 0
      %p235 = por %p233, %p234
      %p236 = scmp.ne.s32.totalorder %s225, %s228
      %p237 = scmp.eq.s32.totalorder %s28, 3
      %p238 = por %p236, %p237
      %p239 = scmp.ne.s32.totalorder %s228, %s229
      %p240 = scmp.eq.s32.totalorder %s28, 0
      %p241 = por %p239, %p240
      %p242 = scmp.ne.s32.totalorder %s228, %s229
      %p243 = scmp.eq.s32.totalorder %s29, 3
      %p244 = por %p242, %p243
      %p246 = scmp.ne.s32.totalorder %s229, %s245
      %p247 = scmp.eq.s32.totalorder %s29, 0
      %p248 = por %p246, %p247
      %p249 = scmp.le.s32.totalorder 1, %s23
      %p250 = scmp.lt.s32.totalorder %s23, 5
      %p251 = pnand %p249, %p250
      %p252 = pneg %p251
      // Predicated region
      $region9: #{tpu_custom_call.1} parent=5 // pred_check
        _
      $region10: #{tpu_custom_call.1} parent=5 // pred_check_branch
        %254 = sbr.rel (%p251) target = $region12
      $region11: #{tpu_custom_call.1} parent=5 // pred_region
        %s255 = ssub.s32 %s23, 1
        // Predicated region
        $region13: #{tpu_custom_call.1} parent=11 // pred_check
          %p256 = pneg %p82
        $region14: #{tpu_custom_call.1} parent=11 // pred_check_branch
          %258 = sbr.rel (%p256) target = $region16
        $region15: #{tpu_custom_call.1} parent=11 // pred_region
          _
        $region16: #{tpu_custom_call.1} parent=11 // pred_fallthru
          _
        // Predicated region
        $region17: #{tpu_custom_call.1} parent=11 // pred_check
          %p259 = pneg %p103
        $region18: #{tpu_custom_call.1} parent=11 // pred_check_branch
          %261 = sbr.rel (%p259) target = $region20
        $region19: #{tpu_custom_call.1} parent=11 // pred_region
          _
        $region20: #{tpu_custom_call.1} parent=11 // pred_fallthru
          _
        // Predicated region
        $region21: #{tpu_custom_call.1} parent=11 // pred_check
          %p262 = pneg %p124
        $region22: #{tpu_custom_call.1} parent=11 // pred_check_branch
          %264 = sbr.rel (%p262) target = $region24
        $region23: #{tpu_custom_call.1} parent=11 // pred_region
          _
        $region24: #{tpu_custom_call.1} parent=11 // pred_fallthru
          _
        // Predicated region
        $region25: #{tpu_custom_call.1} parent=11 // pred_check
          %p265 = pneg %p145
        $region26: #{tpu_custom_call.1} parent=11 // pred_check_branch
          %267 = sbr.rel (%p265) target = $region28
        $region27: #{tpu_custom_call.1} parent=11 // pred_region
          _
        $region28: #{tpu_custom_call.1} parent=11 // pred_fallthru
          _
        // Predicated region
        $region29: #{tpu_custom_call.1} parent=11 // pred_check
          %p268 = pneg %p166
        $region30: #{tpu_custom_call.1} parent=11 // pred_check_branch
          %270 = sbr.rel (%p268) target = $region32
        $region31: #{tpu_custom_call.1} parent=11 // pred_region
          _
        $region32: #{tpu_custom_call.1} parent=11 // pred_fallthru
          _
        // Predicated region
        $region33: #{tpu_custom_call.1} parent=11 // pred_check
          %p271 = pneg %p187
        $region34: #{tpu_custom_call.1} parent=11 // pred_check_branch
          %273 = sbr.rel (%p271) target = $region36
        $region35: #{tpu_custom_call.1} parent=11 // pred_region
          _
        $region36: #{tpu_custom_call.1} parent=11 // pred_fallthru
          _
      $region12: #{tpu_custom_call.1} parent=5 // pred_fallthru
        _
      %p274 = scmp.lt.s32.totalorder %s23, 4
      // Predicated region
      $region37: #{tpu_custom_call.1} parent=5 // pred_check
        %p275 = pneg %p274
      $region38: #{tpu_custom_call.1} parent=5 // pred_check_branch
        %277 = sbr.rel (%p275) target = $region40
      $region39: #{tpu_custom_call.1} parent=5 // pred_region
        // Predicated region
        $region41: #{tpu_custom_call.1} parent=39 // pred_check
          %p278 = pneg %p55
        $region42: #{tpu_custom_call.1} parent=39 // pred_check_branch
          %280 = sbr.rel (%p278) target = $region44
        $region43: #{tpu_custom_call.1} parent=39 // pred_region
          %s281 = sand.u32 %s45, 1
          %s282 = scalar_lea.sflag [#allocation4], %s281
          %s283 = sand.u32 %s45, 1
          %s284 = smul.addr %s283, 16
          %s285 = scalar_lea.vmem [#allocation3], %s284
          %s286 = smul.u32 2, %s30
          %288 = vsyncadd %s282, 0
          %s289 = smul.addr %s286, 8
          %s290 = scalar_lea.hbm %s0, %s289
          %s291 = sshll.u32 %s290, 4
          %s292 = int_to_ptr.hbm [resolvable:$true] %s291
          %s293 = sshll.u32 %s285, 4
          %s294 = int_to_ptr.vmem [resolvable:$true] %s293
          %299 = dma.hbm_to_vmem [thread:$0]  %s292, 256, %s294, %s282, 128, 128, 8
        $region44: #{tpu_custom_call.1} parent=39 // pred_fallthru
          _
        // Predicated region
        $region45: #{tpu_custom_call.1} parent=39 // pred_check
          %p300 = pneg %p207
        $region46: #{tpu_custom_call.1} parent=39 // pred_check_branch
          %302 = sbr.rel (%p300) target = $region48
        $region47: #{tpu_custom_call.1} parent=39 // pred_region
          %s303 = sand.u32 %s197, 1
          %s304 = scalar_lea.sflag [#allocation7], %s303
          %s305 = sand.u32 %s197, 1
          %s306 = smul.addr %s305, 128
          %s307 = scalar_lea.vmem [#allocation6], %s306
          %s308 = smul.u32 2, %s31
          %310 = vsyncadd %s304, 0
          %s311 = smul.addr %s308, 8
          %s312 = scalar_lea.hbm %s7, %s311
          %s313 = sshll.u32 %s312, 4
          %s314 = int_to_ptr.hbm [resolvable:$true] %s313
          %s315 = sshll.u32 %s307, 4
          %s316 = int_to_ptr.vmem [resolvable:$true] %s315
          %321 = dma.hbm_to_vmem [thread:$0]  %s314, 2048, %s316, %s304, 512, 256, 16
        $region48: #{tpu_custom_call.1} parent=39 // pred_fallthru
          _
      $region40: #{tpu_custom_call.1} parent=5 // pred_fallthru
        _
      %p322 = scmp.le.s32.totalorder 1, %s23
      %p323 = scmp.lt.s32.totalorder %s23, 5
      %p324 = pnand %p322, %p323
      %p325 = pneg %p324
      // Predicated region
      $region49: #{tpu_custom_call.1} parent=5 // pred_check
        _
      $region50: #{tpu_custom_call.1} parent=5 // pred_check_branch
        %327 = sbr.rel (%p324) target = $region52
      $region51: #{tpu_custom_call.1} parent=5 // pred_region
        %s328 = ssub.s32 %s23, 1
        %s329 = sand.u32 %s48, 1
        %s330 = scalar_lea.sflag [#allocation4], %s329
        %s331 = sand.u32 %s48, 1
        %s332 = smul.addr %s331, 16
        %s333 = scalar_lea.vmem [#allocation3], %s332
        // Predicated region
        $region53: #{tpu_custom_call.1} parent=51 // pred_check
          %p334 = pneg %p61
        $region54: #{tpu_custom_call.1} parent=51 // pred_check_branch
          %336 = sbr.rel (%p334) target = $region56
        $region55: #{tpu_custom_call.1} parent=51 // pred_region
          %338 = dma.done %s330, 256
        $region56: #{tpu_custom_call.1} parent=51 // pred_fallthru
          _
        %s339 = sand.u32 %s200, 1
        %s340 = scalar_lea.sflag [#allocation7], %s339
        %s341 = sand.u32 %s200, 1
        %s342 = smul.addr %s341, 128
        %s343 = scalar_lea.vmem [#allocation6], %s342
        // Predicated region
        $region57: #{tpu_custom_call.1} parent=51 // pred_check
          %p344 = pneg %p213
        $region58: #{tpu_custom_call.1} parent=51 // pred_check_branch
          %346 = sbr.rel (%p344) target = $region60
        $region59: #{tpu_custom_call.1} parent=51 // pred_region
          %348 = dma.done %s340, 2048
        $region60: #{tpu_custom_call.1} parent=51 // pred_fallthru
          _
        %s349 = sand.u32 %s48, 1
        %s350 = scalar_lea.sflag [#allocation4], %s349
        %s351 = sand.u32 %s48, 1
        %s352 = smul.addr %s351, 16
        %s353 = scalar_lea.vmem [#allocation3], %s352
        %p354 = pneg %p61
        %p355 = pneg %p58
        %p356 = pneg %p82
        %p357 = pneg %p79
        %p358 = pneg %p103
        %p359 = pneg %p100
        %p360 = pneg %p124
        %p361 = pneg %p121
        %p362 = pneg %p145
        %p363 = pneg %p142
        %p364 = pneg %p166
        %p365 = pneg %p163
        %p366 = pneg %p187
        %p367 = pneg %p184
        %s368 = sand.u32 %s200, 1
        %s369 = scalar_lea.sflag [#allocation7], %s368
        %s370 = sand.u32 %s200, 1
        %s371 = smul.addr %s370, 128
        %s372 = scalar_lea.vmem [#allocation6], %s371
        %p373 = pneg %p213
        %p374 = pneg %p210
        %p375 = pneg %p241
        %p376 = pneg %p238
        %s377 = sand.u32 %s228, 1
        %s378 = scalar_lea.sflag [#allocation5], %s377
        %s379 = sand.u32 %s228, 1
        %s380 = smul.addr %s379, 32
        %s381 = scalar_lea.vmem [#allocation8], %s380
        %s382 = smul.u32 2, %s32
        %s383 = smul.u32 2, %s33
        %s384 = smul.u32 2, %s32
        %s385 = smul.u32 2, %s33
        %p386 = scmp.eq.s32.totalorder %s33, 0
        // Predicated region
        $region61: #{tpu_custom_call.1} parent=51 // pred_check
          %p387 = pneg %p386
        $region62: #{tpu_custom_call.1} parent=51 // pred_check_branch
          %389 = sbr.rel (%p387) target = $region64
        $region63: #{tpu_custom_call.1} parent=51 // pred_region
          %v390 = vld [vmem:[%s333] sm:$0xff]
          %v391 = vld [vmem:[%s333 + $0x8] sm:$0xff]
          %v392 = vld [vmem:[%s1] sm:$0xff]
          %v393 = vld [vmem:[%s1 + $0x8] sm:$0xff]
          %v394 = vld [vmem:[%s1 + $0x10] sm:$0xff]
          %v395 = vld [vmem:[%s1 + $0x18] sm:$0xff]
          %v396 = vld [vmem:[%s1 + $0x20] sm:$0xff]
          %v397 = vld [vmem:[%s1 + $0x28] sm:$0xff]
          %v398 = vld [vmem:[%s1 + $0x30] sm:$0xff]
          %v399 = vld [vmem:[%s1 + $0x38] sm:$0xff]
          %v400 = vld [vmem:[%s2] sm:$0x1]
          %v402 = vperm.slane %v400, 0
          %vm404 = vcmask 523264
          %v406 = vsel %vm404, %v390, 0
          %v409 = vsel %vm404, %v391, 0
          %411 = vmatpush.msra.mxu0 0.0
          %412 = vmatpush.msra.mxu0 0.0
          %413 = vmatpush.msra.mxu0 0.0
          %414 = vmatpush.msra.mxu0 0.0
          %415 = vmatpush.msra.mxu0 0.0
          %416 = vmatpush.msra.mxu0 0.0
          %417 = vmatpush.msra.mxu0 0.0
          %418 = vmatpush.msra.mxu0 0.0
          %419 = vmatpush.msra.mxu0 %v399
          %420 = vmatpush.msra.mxu0 %v398
          %421 = vmatpush.msra.mxu0 %v397
          %422 = vmatpush.msra.mxu0 %v396
          %423 = vmatpush.msra.mxu0 %v395
          %424 = vmatpush.msra.mxu0 %v394
          %425 = vmatpush.msra.mxu0 %v393
          %426 = vmatpush.msra.mxu0 %v392
          %427 = vmatmul.f32.gmra.mxu0 %v406
          %v428 = vpop.f32.mrf.mxu0
          %v429 = vadd.f32 %v402, %v428
          %430 = vmatmul.f32.gmra.mxu0 %v409
          %v431 = vpop.f32.mrf.mxu0
          %v432 = vadd.f32 %v402, %v431
          %433 = vdwg.mxu0
          %v434 = vmul.f32 %v429, 0.5
          %v435 = vmul.f32 %v432, 0.5
          %v436 = vmul.f32 %v429, 0.70710677
          %v437 = vmul.f32 %v432, 0.70710677
          %v438 = vmul.f32 %v436, %v436
          %v439 = vmin.f32 16.0, %v438
          %v440 = vmul.f32 %v439, 2.1237322e-06
          %v441 = vadd.f32 %v440, 0.00028619796
          %v442 = vmul.f32 %v439, %v441
          %v443 = vadd.f32 %v442, 0.0036580483
          %v444 = vmul.f32 %v439, %v443
          %v445 = vadd.f32 %v444, 0.05243302
          %v446 = vmul.f32 %v439, %v445
          %v447 = vadd.f32 %v446, 0.18741608
          %v448 = vmul.f32 %v439, %v447
          %v449 = vadd.f32 %v448, 1.1283791
          %v450 = vmul.f32 %v436, %v449
          %v451 = vmul.f32 %v439, 3.8918573e-05
          %v452 = vadd.f32 %v451, 0.001143296
          %v453 = vmul.f32 %v439, %v452
          %v454 = vadd.f32 %v453, 0.014752088
          %v455 = vmul.f32 %v439, %v454
          %v456 = vadd.f32 %v455, 0.112945676
          %v457 = vmul.f32 %v439, %v456
          %v458 = vadd.f32 %v457, 0.4994258
          %v459 = vmul.f32 %v439, %v458
          %v460 = vadd.f32 %v459, 1.0
          %v461 = vrcp.pop %v460
          %v462 = vmul.f32 %v460, %v461
          %v463 = vsub.f32 1.0, %v462
          %v464 = vmul.f32 %v461, %v463
          %v465 = vadd.f32 %v461, %v464
          %vm466 = vweird.f32 %v460
          %vm467 = vweird.f32 %v461
          %vm468 = vmor %vm466, %vm467
          %v469 = vsel %vm468, %v461, %v465
          %v470 = vand.u32 2147483647, %v460
          %vm471 = vcmp.eq.f32.partialorder %v470, 8.507059e+37
          %v472 = vand.u32 %v460, 2147483648
          %v473 = vor.u32 1.1754944e-38, %v472
          %v474 = vsel %vm471, %v473, %v469
          %v475 = vmul.f32 %v450, %v474
          %v476 = vmin.f32 %v475, 1.0
          %v477 = vmax.f32 %v476, -1.0
          %v478 = vmul.f32 %v437, %v437
          %v479 = vmin.f32 16.0, %v478
          %v480 = vmul.f32 %v479, 2.1237322e-06
          %v481 = vadd.f32 %v480, 0.00028619796
          %v482 = vmul.f32 %v479, %v481
          %v483 = vadd.f32 %v482, 0.0036580483
          %v484 = vmul.f32 %v479, %v483
          %v485 = vadd.f32 %v484, 0.05243302
          %v486 = vmul.f32 %v479, %v485
          %v487 = vadd.f32 %v486, 0.18741608
          %v488 = vmul.f32 %v479, %v487
          %v489 = vadd.f32 %v488, 1.1283791
          %v490 = vmul.f32 %v437, %v489
          %v491 = vmul.f32 %v479, 3.8918573e-05
          %v492 = vadd.f32 %v491, 0.001143296
          %v493 = vmul.f32 %v479, %v492
          %v494 = vadd.f32 %v493, 0.014752088
          %v495 = vmul.f32 %v479, %v494
          %v496 = vadd.f32 %v495, 0.112945676
          %v497 = vmul.f32 %v479, %v496
          %v498 = vadd.f32 %v497, 0.4994258
          %v499 = vmul.f32 %v479, %v498
          %v500 = vadd.f32 %v499, 1.0
          %v501 = vrcp.pop %v500
          %v502 = vmul.f32 %v500, %v501
          %v503 = vsub.f32 1.0, %v502
          %v504 = vmul.f32 %v501, %v503
          %v505 = vadd.f32 %v501, %v504
          %vm506 = vweird.f32 %v500
          %vm507 = vweird.f32 %v501
          %vm508 = vmor %vm506, %vm507
          %v509 = vsel %vm508, %v501, %v505
          %v510 = vand.u32 2147483647, %v500
          %vm511 = vcmp.eq.f32.partialorder %v510, 8.507059e+37
          %v512 = vand.u32 %v500, 2147483648
          %v513 = vor.u32 1.1754944e-38, %v512
          %v514 = vsel %vm511, %v513, %v509
          %v515 = vmul.f32 %v490, %v514
          %v516 = vmin.f32 %v515, 1.0
          %v517 = vmax.f32 %v516, -1.0
          %v518 = vadd.f32 %v477, 1.0
          %v519 = vadd.f32 %v517, 1.0
          %v520 = vmul.f32 %v434, %v518
          %v521 = vmul.f32 %v435, %v519
          %v522 = vld [vmem:[%s3] sm:$0xff]
          %v523 = vld [vmem:[%s3 + $0x8] sm:$0xff]
          %v524 = vld [vmem:[%s3 + $0x10] sm:$0xff]
          %v525 = vld [vmem:[%s3 + $0x18] sm:$0xff]
          %v526 = vld [vmem:[%s3 + $0x20] sm:$0xff]
          %v527 = vld [vmem:[%s3 + $0x28] sm:$0xff]
          %v528 = vld [vmem:[%s3 + $0x30] sm:$0xff]
          %v529 = vld [vmem:[%s3 + $0x38] sm:$0xff]
          %v530 = vld [vmem:[%s3 + $0x40] sm:$0xff]
          %v531 = vld [vmem:[%s3 + $0x48] sm:$0xff]
          %v532 = vld [vmem:[%s3 + $0x50] sm:$0xff]
          %v533 = vld [vmem:[%s3 + $0x58] sm:$0xff]
          %v534 = vld [vmem:[%s3 + $0x60] sm:$0xff]
          %v535 = vld [vmem:[%s3 + $0x68] sm:$0xff]
          %v536 = vld [vmem:[%s3 + $0x70] sm:$0xff]
          %v537 = vld [vmem:[%s3 + $0x78] sm:$0xff]
          %v538 = vld [vmem:[%s4] sm:$0x1]
          %v540 = vperm.slane %v538, 0
          %542 = vmatpush.msra.mxu0 %v537
          %543 = vmatpush.msra.mxu0 %v536
          %544 = vmatpush.msra.mxu0 %v535
          %545 = vmatpush.msra.mxu0 %v534
          %546 = vmatpush.msra.mxu0 %v533
          %547 = vmatpush.msra.mxu0 %v532
          %548 = vmatpush.msra.mxu0 %v531
          %549 = vmatpush.msra.mxu0 %v530
          %550 = vmatpush.msra.mxu0 %v529
          %551 = vmatpush.msra.mxu0 %v528
          %552 = vmatpush.msra.mxu0 %v527
          %553 = vmatpush.msra.mxu0 %v526
          %554 = vmatpush.msra.mxu0 %v525
          %555 = vmatpush.msra.mxu0 %v524
          %556 = vmatpush.msra.mxu0 %v523
          %557 = vmatpush.msra.mxu0 %v522
          %558 = vmatmul.f32.gmra.mxu0 %v520
          %v559 = vpop.f32.mrf.mxu0
          %v560 = vadd.f32 %v540, %v559
          %561 = vmatmul.f32.gmra.mxu0 %v521
          %v562 = vpop.f32.mrf.mxu0
          %v563 = vadd.f32 %v540, %v562
          %564 = vdwg.mxu0
          %v565 = vmul.f32 %v560, 0.5
          %v566 = vmul.f32 %v563, 0.5
          %v567 = vmul.f32 %v560, 0.70710677
          %v568 = vmul.f32 %v563, 0.70710677
          %v569 = vmul.f32 %v567, %v567
          %v570 = vmin.f32 16.0, %v569
          %v571 = vmul.f32 %v570, 2.1237322e-06
          %v572 = vadd.f32 %v571, 0.00028619796
          %v573 = vmul.f32 %v570, %v572
          %v574 = vadd.f32 %v573, 0.0036580483
          %v575 = vmul.f32 %v570, %v574
          %v576 = vadd.f32 %v575, 0.05243302
          %v577 = vmul.f32 %v570, %v576
          %v578 = vadd.f32 %v577, 0.18741608
          %v579 = vmul.f32 %v570, %v578
          %v580 = vadd.f32 %v579, 1.1283791
          %v581 = vmul.f32 %v567, %v580
          %v582 = vmul.f32 %v570, 3.8918573e-05
          %v583 = vadd.f32 %v582, 0.001143296
          %v584 = vmul.f32 %v570, %v583
          %v585 = vadd.f32 %v584, 0.014752088
          %v586 = vmul.f32 %v570, %v585
          %v587 = vadd.f32 %v586, 0.112945676
          %v588 = vmul.f32 %v570, %v587
          %v589 = vadd.f32 %v588, 0.4994258
          %v590 = vmul.f32 %v570, %v589
          %v591 = vadd.f32 %v590, 1.0
          %v592 = vrcp.pop %v591
          %v593 = vmul.f32 %v591, %v592
          %v594 = vsub.f32 1.0, %v593
          %v595 = vmul.f32 %v592, %v594
          %v596 = vadd.f32 %v592, %v595
          %vm597 = vweird.f32 %v591
          %vm598 = vweird.f32 %v592
          %vm599 = vmor %vm597, %vm598
          %v600 = vsel %vm599, %v592, %v596
          %v601 = vand.u32 2147483647, %v591
          %vm602 = vcmp.eq.f32.partialorder %v601, 8.507059e+37
          %v603 = vand.u32 %v591, 2147483648
          %v604 = vor.u32 1.1754944e-38, %v603
          %v605 = vsel %vm602, %v604, %v600
          %v606 = vmul.f32 %v581, %v605
          %v607 = vmin.f32 %v606, 1.0
          %v608 = vmax.f32 %v607, -1.0
          %v609 = vmul.f32 %v568, %v568
          %v610 = vmin.f32 16.0, %v609
          %v611 = vmul.f32 %v610, 2.1237322e-06
          %v612 = vadd.f32 %v611, 0.00028619796
          %v613 = vmul.f32 %v610, %v612
          %v614 = vadd.f32 %v613, 0.0036580483
          %v615 = vmul.f32 %v610, %v614
          %v616 = vadd.f32 %v615, 0.05243302
          %v617 = vmul.f32 %v610, %v616
          %v618 = vadd.f32 %v617, 0.18741608
          %v619 = vmul.f32 %v610, %v618
          %v620 = vadd.f32 %v619, 1.1283791
          %v621 = vmul.f32 %v568, %v620
          %v622 = vmul.f32 %v610, 3.8918573e-05
          %v623 = vadd.f32 %v622, 0.001143296
          %v624 = vmul.f32 %v610, %v623
          %v625 = vadd.f32 %v624, 0.014752088
          %v626 = vmul.f32 %v610, %v625
          %v627 = vadd.f32 %v626, 0.112945676
          %v628 = vmul.f32 %v610, %v627
          %v629 = vadd.f32 %v628, 0.4994258
          %v630 = vmul.f32 %v610, %v629
          %v631 = vadd.f32 %v630, 1.0
          %v632 = vrcp.pop %v631
          %v633 = vmul.f32 %v631, %v632
          %v634 = vsub.f32 1.0, %v633
          %v635 = vmul.f32 %v632, %v634
          %v636 = vadd.f32 %v632, %v635
          %vm637 = vweird.f32 %v631
          %vm638 = vweird.f32 %v632
          %vm639 = vmor %vm637, %vm638
          %v640 = vsel %vm639, %v632, %v636
          %v641 = vand.u32 2147483647, %v631
          %vm642 = vcmp.eq.f32.partialorder %v641, 8.507059e+37
          %v643 = vand.u32 %v631, 2147483648
          %v644 = vor.u32 1.1754944e-38, %v643
          %v645 = vsel %vm642, %v644, %v640
          %v646 = vmul.f32 %v621, %v645
          %v647 = vmin.f32 %v646, 1.0
          %v648 = vmax.f32 %v647, -1.0
          %v649 = vadd.f32 %v608, 1.0
          %v650 = vadd.f32 %v648, 1.0
          %v651 = vmul.f32 %v565, %v649
          %v652 = vmul.f32 %v566, %v650
          %v653 = vld [vmem:[%s5] sm:$0xff]
          %v654 = vld [vmem:[%s5 + $0x8] sm:$0xff]
          %v655 = vld [vmem:[%s5 + $0x10] sm:$0xff]
          %v656 = vld [vmem:[%s5 + $0x18] sm:$0xff]
          %v657 = vld [vmem:[%s5 + $0x20] sm:$0xff]
          %v658 = vld [vmem:[%s5 + $0x28] sm:$0xff]
          %v659 = vld [vmem:[%s5 + $0x30] sm:$0xff]
          %v660 = vld [vmem:[%s5 + $0x38] sm:$0xff]
          %v661 = vld [vmem:[%s5 + $0x40] sm:$0xff]
          %v662 = vld [vmem:[%s5 + $0x48] sm:$0xff]
          %v663 = vld [vmem:[%s5 + $0x50] sm:$0xff]
          %v664 = vld [vmem:[%s5 + $0x58] sm:$0xff]
          %v665 = vld [vmem:[%s5 + $0x60] sm:$0xff]
          %v666 = vld [vmem:[%s5 + $0x68] sm:$0xff]
          %v667 = vld [vmem:[%s5 + $0x70] sm:$0xff]
          %v668 = vld [vmem:[%s5 + $0x78] sm:$0xff]
          %v669 = vld [vmem:[%s6] sm:$0x1]
          %v671 = vperm.slane %v669, 0
          %673 = vmatpush.msra.mxu0 %v668
          %674 = vmatpush.msra.mxu0 %v667
          %675 = vmatpush.msra.mxu0 %v666
          %676 = vmatpush.msra.mxu0 %v665
          %677 = vmatpush.msra.mxu0 %v664
          %678 = vmatpush.msra.mxu0 %v663
          %679 = vmatpush.msra.mxu0 %v662
          %680 = vmatpush.msra.mxu0 %v661
          %681 = vmatpush.msra.mxu0 %v660
          %682 = vmatpush.msra.mxu0 %v659
          %683 = vmatpush.msra.mxu0 %v658
          %684 = vmatpush.msra.mxu0 %v657
          %685 = vmatpush.msra.mxu0 %v656
          %686 = vmatpush.msra.mxu0 %v655
          %687 = vmatpush.msra.mxu0 %v654
          %688 = vmatpush.msra.mxu0 %v653
          %689 = vmatmul.f32.gmra.mxu0 %v651
          %v690 = vpop.f32.mrf.mxu0
          %v691 = vadd.f32 %v671, %v690
          %692 = vmatmul.f32.gmra.mxu0 %v652
          %v693 = vpop.f32.mrf.mxu0
          %v694 = vadd.f32 %v671, %v693
          %695 = vdwg.mxu0
          %v696 = vmul.f32 %v691, %v691
          %v697 = vmul.f32 %v694, %v694
          %v698 = vsel %vm404, %v696, 0.0
          %699 = vadd.xlane.f32.xlu0 %v698
          %v700 = vpop.xlane.xlu0 %699
          %v701 = vsel %vm404, %v697, 0.0
          %702 = vadd.xlane.f32.xlu0 %v701
          %v703 = vpop.xlane.xlu0 %702
          %v704 = vmax.f32 %v700, 1e-24
          %v705 = vmax.f32 %v703, 1e-24
          %v706 = vrsqrt.pop %v704
          %v707 = vmul.f32 %v706, %v704
          %v708 = vmul.f32 %v707, %v706
          %v709 = vmul.f32 0.5, %v708
          %v710 = vsub.f32 1.5, %v709
          %v711 = vmul.f32 %v706, %v710
          %vm712 = vweird.f32 %v704
          %vm713 = vweird.f32 %v706
          %vm714 = vmor %vm712, %vm713
          %v715 = vsel %vm714, %v706, %v711
          %v716 = vrsqrt.pop %v705
          %v717 = vmul.f32 %v716, %v705
          %v718 = vmul.f32 %v717, %v716
          %v719 = vmul.f32 0.5, %v718
          %v720 = vsub.f32 1.5, %v719
          %v721 = vmul.f32 %v716, %v720
          %vm722 = vweird.f32 %v705
          %vm723 = vweird.f32 %v716
          %vm724 = vmor %vm722, %vm723
          %v725 = vsel %vm724, %v716, %v721
          %v726 = vmul.f32 %v691, %v715
          %v727 = vmul.f32 %v694, %v725
          %728 = vst.msk [vmem:[#allocation2] sm:$0xff] %vm404, %v726
          %729 = vst.msk [vmem:[#allocation2 + $0x8] sm:$0xff] %vm404, %v727
        $region64: #{tpu_custom_call.1} parent=51 // pred_fallthru
          _
        %v730 = vld [vmem:[#allocation2] sm:$0xff]
        %v731 = vld [vmem:[#allocation2 + $0x8] sm:$0xff]
        %v732 = vld [vmem:[%s343] sm:$0xff]
        %v733 = vld [vmem:[%s343 + $0x8] sm:$0xff]
        %v734 = vld [vmem:[%s343 + $0x10] sm:$0xff]
        %v735 = vld [vmem:[%s343 + $0x18] sm:$0xff]
        %v736 = vld [vmem:[%s343 + $0x20] sm:$0xff]
        %v737 = vld [vmem:[%s343 + $0x28] sm:$0xff]
        %v738 = vld [vmem:[%s343 + $0x30] sm:$0xff]
        %v739 = vld [vmem:[%s343 + $0x38] sm:$0xff]
        %v740 = vld [vmem:[%s343 + $0x40] sm:$0xff]
        %v741 = vld [vmem:[%s343 + $0x48] sm:$0xff]
        %v742 = vld [vmem:[%s343 + $0x50] sm:$0xff]
        %v743 = vld [vmem:[%s343 + $0x58] sm:$0xff]
        %v744 = vld [vmem:[%s343 + $0x60] sm:$0xff]
        %v745 = vld [vmem:[%s343 + $0x68] sm:$0xff]
        %v746 = vld [vmem:[%s343 + $0x70] sm:$0xff]
        %v747 = vld [vmem:[%s343 + $0x78] sm:$0xff]
        %vm748 = vcmask 523264
        %v750 = vsel %vm748, %v730, 0
        %v753 = vsel %vm748, %v731, 0
        %755 = vmatpush.msra.mxu0 0.0
        %756 = vmatpush.msra.mxu0 0.0
        %757 = vmatpush.msra.mxu0 0.0
        %758 = vmatpush.msra.mxu0 0.0
        %759 = vmatpush.msra.mxu0 0.0
        %760 = vmatpush.msra.mxu0 0.0
        %761 = vmatpush.msra.mxu0 0.0
        %762 = vmatpush.msra.mxu0 0.0
        %763 = vmatpush.msra.mxu0 %v746
        %764 = vmatpush.msra.mxu0 %v744
        %765 = vmatpush.msra.mxu0 %v742
        %766 = vmatpush.msra.mxu0 %v740
        %767 = vmatpush.msra.mxu0 %v738
        %768 = vmatpush.msra.mxu0 %v736
        %769 = vmatpush.msra.mxu0 %v734
        %770 = vmatpush.msra.mxu0 %v732
        %771 = vmatmul.f32.gmra.mxu0 %v750
        %v772 = vpop.f32.mrf.mxu0
        %v773 = vadd.f32 0.0, %v772
        %774 = vmatmul.f32.gmra.mxu0 %v753
        %v775 = vpop.f32.mrf.mxu0
        %v776 = vadd.f32 0.0, %v775
        %777 = vdwg.mxu0
        %778 = vmatpush.msra.mxu0 0.0
        %779 = vmatpush.msra.mxu0 0.0
        %780 = vmatpush.msra.mxu0 0.0
        %781 = vmatpush.msra.mxu0 0.0
        %782 = vmatpush.msra.mxu0 0.0
        %783 = vmatpush.msra.mxu0 0.0
        %784 = vmatpush.msra.mxu0 0.0
        %785 = vmatpush.msra.mxu0 0.0
        %786 = vmatpush.msra.mxu0 %v747
        %787 = vmatpush.msra.mxu0 %v745
        %788 = vmatpush.msra.mxu0 %v743
        %789 = vmatpush.msra.mxu0 %v741
        %790 = vmatpush.msra.mxu0 %v739
        %791 = vmatpush.msra.mxu0 %v737
        %792 = vmatpush.msra.mxu0 %v735
        %793 = vmatpush.msra.mxu0 %v733
        %794 = vmatmul.f32.gmra.mxu0 %v750
        %v795 = vpop.f32.mrf.mxu0
        %v796 = vadd.f32 0.0, %v795
        %797 = vmatmul.f32.gmra.mxu0 %v753
        %v798 = vpop.f32.mrf.mxu0
        %v799 = vadd.f32 0.0, %v798
        %800 = vdwg.mxu0
        %801 = vst [vmem:[%s381] sm:$0xff] %v773
        %802 = vst [vmem:[%s381 + $0x8] sm:$0xff] %v796
        %803 = vst [vmem:[%s381 + $0x10] sm:$0xff] %v776
        %804 = vst [vmem:[%s381 + $0x18] sm:$0xff] %v799
        %s805 = sand.u32 %s228, 1
        %s806 = scalar_lea.sflag [#allocation5], %s805
        %s807 = sand.u32 %s228, 1
        %s808 = smul.addr %s807, 32
        %s809 = scalar_lea.vmem [#allocation8], %s808
        // Predicated region
        $region65: #{tpu_custom_call.1} parent=51 // pred_check
          %p810 = pneg %p238
        $region66: #{tpu_custom_call.1} parent=51 // pred_check_branch
          %812 = sbr.rel (%p810) target = $region68
        $region67: #{tpu_custom_call.1} parent=51 // pred_region
          %s813 = smul.u32 2, %s32
          %s814 = smul.u32 2, %s33
          %816 = vsyncadd %s806, 0
          %s817 = smul.addr %s813, 4
          %s818 = sadd.s32 %s814, %s817
          %s819 = smul.addr %s818, 8
          %s820 = scalar_lea.hbm %s8, %s819
          %s821 = sshll.u32 %s809, 4
          %s822 = int_to_ptr.vmem [resolvable:$true] %s821
          %s823 = sshll.u32 %s820, 4
          %s824 = int_to_ptr.hbm [resolvable:$true] %s823
          %829 = dma.vmem_to_hbm [thread:$0]  %s822, 512, %s824, %s806, 256, 512, 16
        $region68: #{tpu_custom_call.1} parent=51 // pred_fallthru
          _
      $region52: #{tpu_custom_call.1} parent=5 // pred_fallthru
        _
      %p830 = scmp.le.s32.totalorder 2, %s23
      // Predicated region
      $region69: #{tpu_custom_call.1} parent=5 // pred_check
        %p831 = pneg %p830
      $region70: #{tpu_custom_call.1} parent=5 // pred_check_branch
        %833 = sbr.rel (%p831) target = $region72
      $region71: #{tpu_custom_call.1} parent=5 // pred_region
        %s834 = ssub.s32 %s23, 2
        // Predicated region
        $region73: #{tpu_custom_call.1} parent=71 // pred_check
          %p835 = pneg %p244
        $region74: #{tpu_custom_call.1} parent=71 // pred_check_branch
          %837 = sbr.rel (%p835) target = $region76
        $region75: #{tpu_custom_call.1} parent=71 // pred_region
          %s838 = sand.u32 %s229, 1
          %s839 = scalar_lea.sflag [#allocation5], %s838
          %s840 = sand.u32 %s229, 1
          %s841 = smul.addr %s840, 32
          %s842 = scalar_lea.vmem [#allocation8], %s841
          %844 = dma.done %s839, 512
        $region76: #{tpu_custom_call.1} parent=71 // pred_fallthru
          _
      $region72: #{tpu_custom_call.1} parent=5 // pred_fallthru
        _
    $region6: #{tpu_custom_call.1} parent=1 // loop_footer
      %s27 = sadd.s32 1, %s23
    $region7: #{tpu_custom_call.1} parent=1 // loop_footer_branch
      %22 = sbr.rel target = $region3
    $region8: #{tpu_custom_call.1} parent=1 // loop_exit
      _
    %845 = vsyncpa [#allocation4], 1
    %s846 = scalar_lea.sflag [#allocation4], 1
    %847 = vsyncpa %s846, 1
    %848 = vsyncpa [#allocation7], 1
    %s849 = scalar_lea.sflag [#allocation7], 1
    %850 = vsyncpa %s849, 1
    %851 = vsyncpa [#allocation5], 1
    %s852 = scalar_lea.sflag [#allocation5], 1
    %853 = vsyncpa %s852, 1

</llo_original>
